<compile_context>
chip_gen: v5e
topology: v5e:2x2
jax: 0.10.0
libtpu: 0.0.40
codegen_flags: <defaults>
</compile_context>

<pallas_src>
import math

import jax
import jax.numpy as jnp
from jax.experimental import pallas as pl
from jax.experimental.pallas import tpu as pltpu


def _dyt_kernel(x_ref, gamma_ref, alpha_ref, beta_ref, o_ref):
    # x_ref:     (tile_r, tile_c) tile of the (folded) input, channels on lanes
    # gamma_ref: (1, tile_c)      per-channel scale, broadcast over rows
    # alpha_ref: (1,) scalar in SMEM;  beta_ref: (1,) scalar in SMEM
    alpha = alpha_ref[0]
    beta = beta_ref[0]
    y = jnp.tanh(x_ref[...] * alpha)                     # VPU mul + EUP tanh
    o_ref[...] = (gamma_ref[...] * y + beta).astype(o_ref.dtype)


def _vmem_plan():
    """(block_target_bytes, vmem_limit_bytes) tuned per TPU generation."""
    kind = ""
    try:
        kind = jax.devices()[0].device_kind.lower()
    except Exception:
        pass
    if "v5 lite" in kind or "v5e" in kind or "v5litepod" in kind:
        # v5e: 16 MiB scoped default / 128 MiB physical; HBM slow enough that
        # 2 MiB steps already hide the per-step overhead.
        return 2 << 20, 32 << 20
    if "v6" in kind:
        # v6e: 128 MiB physical VMEM, 1.4 TB/s HBM -> bigger blocks pay off.
        return 8 << 20, 96 << 20
    # v7x (64 MiB VMEM per TC) and unknown chips: conservative middle ground.
    return 4 << 20, 48 << 20


def _pick_tiles(n_rows, n_cols, itemsize, target_bytes):
    """Pick (tile_r, tile_c) keeping one block <= ~target_bytes.

    tile_c stays a multiple of 128 (lane-dense) and divides n_cols; tile_r is a
    multiple of the packed-sublane count for the dtype (8/16/32) unless the
    full row extent is used.
    """
    sub = max(8, 32 // max(1, itemsize))          # packed sublane multiple

    # Column tiling only when even `sub` rows of the full width blow the budget
    # and the width is a multiple of 128 (so every column block is lane-dense).
    tile_c = n_cols
    if n_cols % 128 == 0:
        while tile_c % 256 == 0 and sub * tile_c * itemsize > target_bytes:
            tile_c //= 2                          # stays a multiple of 128, divides n_cols

    max_rows = max(sub, target_bytes // max(1, tile_c * itemsize))
    if n_rows <= max_rows:
        tile_r = n_rows                           # full extent -> always legal
    else:
        tile_r = sub
        while tile_r * 2 <= max_rows:
            tile_r *= 2                           # sublane-aligned; tail block masked
    return tile_r, tile_c


def _dyt_call(x2, gamma2, alpha, beta, target_bytes, vmem_limit):
    """Run the kernel on a 2-D (rows, channels*fold) view."""
    Rk, Ck = x2.shape
    tile_r, tile_c = _pick_tiles(Rk, Ck, x2.dtype.itemsize, target_bytes)
    grid = (pl.cdiv(Rk, tile_r), pl.cdiv(Ck, tile_c))

    return pl.pallas_call(
        _dyt_kernel,
        out_shape=jax.ShapeDtypeStruct((Rk, Ck), x2.dtype),
        grid=grid,
        in_specs=[
            pl.BlockSpec((tile_r, tile_c), lambda i, j: (i, j)),       # x tile
            pl.BlockSpec((1, tile_c), lambda i, j: (0, j)),            # gamma
            pl.BlockSpec(memory_space=pltpu.MemorySpace.SMEM),         # alpha
            pl.BlockSpec(memory_space=pltpu.MemorySpace.SMEM),         # beta
        ],
        out_specs=pl.BlockSpec((tile_r, tile_c), lambda i, j: (i, j)),
        compiler_params=pltpu.CompilerParams(
            # "parallel" on both axes: independent tiles, lets megacore chips
            # (v7x: 2 TensorCores) shard the grid; no-op on v5e/v6e.
            dimension_semantics=("parallel", "parallel"),
            vmem_limit_bytes=vmem_limit,
        ),
    )(x2, gamma2, alpha, beta)


def dyt(x, alpha, gamma, beta):
    """out = gamma * tanh(alpha * x) + beta.

    x: (..., C); alpha, beta: (1,); gamma: (C,).  Returns the same shape as x.
    """
    orig_shape = x.shape
    C = gamma.shape[0]
    assert orig_shape[-1] == C, (orig_shape, C)
    R = math.prod(orig_shape[:-1]) if len(orig_shape) > 1 else 1

    target_bytes, vmem_limit = _vmem_plan()

    # Free contiguous reshape (no transpose -> no extra HBM pass over x).
    x2 = x.reshape(R, C)
    gamma2 = gamma.reshape(1, C)

    # Fold factor so the folded last dim is a multiple of 128 (lane-dense vst).
    k = 128 // math.gcd(C, 128)

    if k == 1:
        out2 = _dyt_call(x2, gamma2, alpha, beta, target_bytes, vmem_limit)
        return out2.reshape(orig_shape)

    R_bulk = (R // k) * k
    rem = R - R_bulk
    parts = []

    if R_bulk > 0:
        # Pure reshape of a contiguous prefix (the whole array when rem == 0):
        # (R_bulk, C) -> (R_bulk/k, k*C), gamma tiled k times (tiny).
        xb = (x2 if rem == 0 else x2[:R_bulk]).reshape(R_bulk // k, k * C)
        gb = jnp.tile(gamma2, (1, k))
        ob = _dyt_call(xb, gb, alpha, beta, target_bytes, vmem_limit)
        parts.append(ob.reshape(R_bulk, C))

    if rem > 0:
        # Tiny remainder (< k <= 128 rows): run unfolded; masked stores here
        # are negligible compared with the lane-dense bulk call.
        orr = _dyt_call(x2[R_bulk:], gamma2, alpha, beta,
                        target_bytes, vmem_limit)
        parts.append(orr)

    out2 = parts[0] if len(parts) == 1 else jnp.concatenate(parts, axis=0)
    return out2.reshape(orig_shape)


def _reference(x, alpha, gamma, beta):
    """Pure-JAX reference mirroring the PyTorch forward."""
    return gamma * jnp.tanh(alpha * x) + beta


if __name__ == "__main__":
    init_alpha = 0.5
    key = jax.random.PRNGKey(0)
    kx, kg, ka, kb, kx2 = jax.random.split(key, 5)

    # Module-style parameters (perturbed so gamma/beta paths are exercised).
    C = 32
    alpha = jnp.ones((1,), jnp.float32) * init_alpha \
        + 0.1 * jax.random.normal(ka, (1,), dtype=jnp.float32)
    gamma = jnp.ones((C,), jnp.float32) * init_alpha \
        + 0.1 * jax.random.normal(kg, (C,), dtype=jnp.float32)
    beta = jnp.zeros((1,), jnp.float32) \
        + 0.1 * jax.random.normal(kb, (1,), dtype=jnp.float32)

    # Case 1: rows divide the fold factor (single lane-dense folded call).
    x = jax.random.normal(kx, (2, 8, C), dtype=jnp.float32)
    out = jax.block_until_ready(dyt(x, alpha, gamma, beta))
    ref = _reference(x, alpha, gamma, beta)
    assert out.shape == x.shape, out.shape
    assert jnp.allclose(out, ref, atol=1e-5, rtol=1e-5), (
        float(jnp.max(jnp.abs(out - ref))))

    # Case 2: ragged row count (R % k != 0) -> lane-dense bulk + tiny remainder.
    x_rag = jax.random.normal(kx2, (3, 5, C), dtype=jnp.float32)
    out_rag = jax.block_until_ready(dyt(x_rag, alpha, gamma, beta))
    ref_rag = _reference(x_rag, alpha, gamma, beta)
    assert out_rag.shape == x_rag.shape, out_rag.shape
    assert jnp.allclose(out_rag, ref_rag, atol=1e-5, rtol=1e-5), (
        float(jnp.max(jnp.abs(out_rag - ref_rag))))

    print("KERNEL_OK")
</pallas_src>

<mosaic_0001>
module attributes {stable_mosaic.version = 11 : i64} {
  func.func @_dyt_kernel(%arg0: i32, %arg1: i32, %arg2: memref<4x128xf32, #tpu.memory_space<vmem>>, %arg3: memref<1x128xf32, #tpu.memory_space<vmem>>, %arg4: memref<1xf32, #tpu.memory_space<smem>>, %arg5: memref<1xf32, #tpu.memory_space<smem>>, %arg6: memref<4x128xf32, #tpu.memory_space<vmem>>) attributes {dimension_semantics = [#tpu.dimension_semantics<parallel>, #tpu.dimension_semantics<parallel>], iteration_bounds = array<i64: 1, 1>, scalar_prefetch = 0 : i64, scratch_operands = 0 : i64, tpu.core_type = #tpu.core_type<tc>, window_params = [{transform_indices = @transform_0, window_bounds = array<i64: 4, 128>}, {transform_indices = @transform_1, window_bounds = array<i64: 1, 128>}, {transform_indices = @transform_2, window_bounds = array<i64: 1>}, {transform_indices = @transform_3, window_bounds = array<i64: 1>}, {transform_indices = @transform_4, window_bounds = array<i64: 4, 128>}]} {
    %c0 = arith.constant 0 : index
    %0 = memref.load %arg4[%c0] : memref<1xf32, #tpu.memory_space<smem>>
    %c0_0 = arith.constant 0 : index
    %1 = memref.load %arg5[%c0_0] : memref<1xf32, #tpu.memory_space<smem>>
    %c0_1 = arith.constant 0 : index
    %c0_2 = arith.constant 0 : index
    %2 = vector.load %arg2[%c0_1, %c0_2] : memref<4x128xf32, #tpu.memory_space<vmem>>, vector<4x128xf32>
    %3 = vector.broadcast %0 : f32 to vector<4x128xf32>
    %4 = arith.mulf %2, %3 : vector<4x128xf32>
    %5 = math.tanh %4 : vector<4x128xf32>
    %c0_3 = arith.constant 0 : index
    %c0_4 = arith.constant 0 : index
    %6 = vector.load %arg3[%c0_3, %c0_4] : memref<1x128xf32, #tpu.memory_space<vmem>>, vector<1x128xf32>
    %7 = vector.broadcast %6 : vector<1x128xf32> to vector<4x128xf32>
    %8 = arith.mulf %7, %5 : vector<4x128xf32>
    %9 = vector.broadcast %1 : f32 to vector<4x128xf32>
    %10 = arith.addf %8, %9 : vector<4x128xf32>
    %c0_5 = arith.constant 0 : index
    %c0_6 = arith.constant 0 : index
    %11 = vector.load %arg6[%c0_5, %c0_6] : memref<4x128xf32, #tpu.memory_space<vmem>>, vector<4x128xf32>
    tpu.vector_store %arg6[%c0_5, %c0_6], %10 {strides = array<i32>} : memref<4x128xf32, #tpu.memory_space<vmem>>, vector<4x128xf32>,
    return
  }
  func.func @transform_0(%arg0: i32, %arg1: i32) -> (i32, i32) {
    %c0_i32 = arith.constant 0 : i32
    return %arg0, %arg1 : i32, i32
  }
  func.func @transform_1(%arg0: i32, %arg1: i32) -> (i32, i32) {
    %c0_i32 = arith.constant 0 : i32
    %c0_i32_0 = arith.constant 0 : i32
    return %c0_i32, %arg1 : i32, i32
  }
  func.func @transform_2(%arg0: i32, %arg1: i32) -> i32 {
    %c0_i32 = arith.constant 0 : i32
    %c0_i32_0 = arith.constant 0 : i32
    return %c0_i32 : i32
  }
  func.func @transform_3(%arg0: i32, %arg1: i32) -> i32 {
    %c0_i32 = arith.constant 0 : i32
    %c0_i32_0 = arith.constant 0 : i32
    return %c0_i32 : i32
  }
  func.func @transform_4(%arg0: i32, %arg1: i32) -> (i32, i32) {
    %c0_i32 = arith.constant 0 : i32
    return %arg0, %arg1 : i32, i32
  }
}

</mosaic_0001>

<llo_original>
// kernel: tpu_custom_call.1
$region0: #{tpu_custom_call.1}
  #allocation0 [shape = 'u32[]', space=smem, size = 0x4, offset = 0x4, fixed_abs, tag = 'smem constant byte address 0x4 - core index']
  #allocation1 [shape = 'u32[72,128]{1,0:T(1,128)}', space=vmem, size = 0x9000, scoped, tag = 'internal scratch']
  #allocation2 [shape = 'f32[1]{0:T(128)S(6)}', space=smem, size = 0x200, scoped, tag = 'scoped memory for tpu_custom_call.1']
  #allocation3 [shape = 'f32[1]{0:T(128)S(6)}', space=smem, size = 0x200, scoped, tag = 'scoped memory for tpu_custom_call.1']
  %s0 = inlined_call_operand.vmem [shape: f32[4,128], index: 0, kind: input, shape index: {}]
  %s1 = inlined_call_operand.hbm [shape: f32[1,128], index: 1, kind: input, shape index: {}]
  %s2 = inlined_call_operand.<no memory space> [shape: f32[1], index: 2, kind: input, shape index: {}]
  %s3 = inlined_call_operand.<no memory space> [shape: f32[1], index: 3, kind: input, shape index: {}]
  %s4 = inlined_call_operand.hbm [shape: f32[4,128], index: 4, kind: output, shape index: {}]
  %s5 = sld [smem:[#allocation0]]
  $region30: #{tpu_custom_call.1} parent=0
    _
  %s7 = ssub.s32 1, %s5
  %s8 = scalar_select 0, %s7, %s5
  %9 = sst [smem:[#allocation2]] %s2
  %10 = sst [smem:[#allocation3]] %s3
  $region1: #{tpu_custom_call.1} parent=0
    #allocation4 [shape = 'u8[512]{0}', space=vmem, size = 0x400, scoped, tag = 'input window, operand 1, single buffered']
    #allocation5 [shape = 's32[1]{0}', space=sflag, size = 0x4, scoped, tag = 'scoped memory for tpu_custom_call.1']
    #allocation6 [shape = 's32[1]{0}', space=sflag, size = 0x4, scoped, tag = 'scoped memory for tpu_custom_call.1']
    #allocation7 [shape = 'u8[2048]{0}', space=vmem, size = 0x800, scoped, tag = 'output window, operand 0, single buffered']
    %11 = vsyncpa [#allocation5], 0
    %12 = vsyncpa [#allocation6], 0
    // Predicated region
    $region2: #{tpu_custom_call.1} parent=1 // pred_check
      _
    $region3: #{tpu_custom_call.1} parent=1 // pred_check_branch
      %14 = sbr.rel (0) target = $region5
    $region4: #{tpu_custom_call.1} parent=1 // pred_region
      _
    $region5: #{tpu_custom_call.1} parent=1 // pred_fallthru
      _
    // Predicated region
    $region6: #{tpu_custom_call.1} parent=1 // pred_check
      _
    $region7: #{tpu_custom_call.1} parent=1 // pred_check_branch
      %16 = sbr.rel (0) target = $region9
    $region8: #{tpu_custom_call.1} parent=1 // pred_region
      %18 = vsyncadd [#allocation5], 0
      %s20 = sshll.u32 %s1, 4
      %s21 = int_to_ptr.hbm [resolvable:$true] %s20
      %s22 = sshll.u32 [#allocation4], 4
      %s23 = int_to_ptr.vmem [resolvable:$true] %s22
      %25 = dma.hbm_to_vmem [thread:$0]  %s21, 16, %s23, [#allocation5]
    $region9: #{tpu_custom_call.1} parent=1 // pred_fallthru
      _
    // Predicated region
    $region10: #{tpu_custom_call.1} parent=1 // pred_check
      _
    $region11: #{tpu_custom_call.1} parent=1 // pred_check_branch
      %27 = sbr.rel (0) target = $region13
    $region12: #{tpu_custom_call.1} parent=1 // pred_region
      _
    $region13: #{tpu_custom_call.1} parent=1 // pred_fallthru
      _
    // Predicated region
    $region14: #{tpu_custom_call.1} parent=1 // pred_check
      _
    $region15: #{tpu_custom_call.1} parent=1 // pred_check_branch
      %29 = sbr.rel (0) target = $region17
    $region16: #{tpu_custom_call.1} parent=1 // pred_region
      _
    $region17: #{tpu_custom_call.1} parent=1 // pred_fallthru
      _
    // Predicated region
    $region18: #{tpu_custom_call.1} parent=1 // pred_check
      _
    $region19: #{tpu_custom_call.1} parent=1 // pred_check_branch
      %31 = sbr.rel (0) target = $region21
    $region20: #{tpu_custom_call.1} parent=1 // pred_region
      %33 = dma.done [#allocation5], 16
    $region21: #{tpu_custom_call.1} parent=1 // pred_fallthru
      _
    %s34 = sld [smem:[#allocation2]]
    %s35 = sld [smem:[#allocation3]]
    %v36 = vld [vmem:[%s0] sm:$0xf]
    %v37 = vstv %s34
    %v38 = vmul.f32 %v36, %v37
    %v39 = vtanh.pop %v38
    %v40 = vld [vmem:[#allocation4] sm:$0x1]
    %v42 = vperm.slane %v40, 0
    %v44 = vmul.f32 %v42, %v39
    %v45 = vstv %s35
    %v46 = vadd.f32 %v44, %v45
    %47 = vst [vmem:[#allocation7] sm:$0xf] %v46
    // Predicated region
    $region22: #{tpu_custom_call.1} parent=1 // pred_check
      _
    $region23: #{tpu_custom_call.1} parent=1 // pred_check_branch
      %49 = sbr.rel (0) target = $region25
    $region24: #{tpu_custom_call.1} parent=1 // pred_region
      %51 = vsyncadd [#allocation6], 0
      %s53 = sshll.u32 [#allocation7], 4
      %s54 = int_to_ptr.vmem [resolvable:$true] %s53
      %s55 = sshll.u32 %s4, 4
      %s56 = int_to_ptr.hbm [resolvable:$true] %s55
      %58 = dma.vmem_to_hbm [thread:$0]  %s54, 64, %s56, [#allocation6]
    $region25: #{tpu_custom_call.1} parent=1 // pred_fallthru
      _
    // Predicated region
    $region26: #{tpu_custom_call.1} parent=1 // pred_check
      _
    $region27: #{tpu_custom_call.1} parent=1 // pred_check_branch
      %60 = sbr.rel (0) target = $region29
    $region28: #{tpu_custom_call.1} parent=1 // pred_region
      %62 = dma.done [#allocation6], 64
    $region29: #{tpu_custom_call.1} parent=1 // pred_fallthru
      _
    %63 = vsyncpa [#allocation5], 1
    %64 = vsyncpa [#allocation6], 1

</llo_original>
